<compile_context>
chip_gen: v7x
topology: tpu7x:2x2x1
jax: 0.10.0
libtpu: 0.0.40
codegen_flags: <defaults>
</compile_context>

<pallas_src>
import functools

import jax
import jax.numpy as jnp
from jax.experimental import pallas as pl
from jax.experimental.pallas import tpu as pltpu


def _rmsnorm_kernel(x_ref, o_ref, *, eps, inv_hidden, approx_recip):
    # Sum of squares over the lane (normalized) axis, accumulated in f32.
    # Not binding a full-tile f32 temp lets Mosaic stream upcast+square into
    # the reduce one vreg at a time instead of holding a +4 B/elem VMEM temp.
    ms = (
        jnp.sum(jnp.square(x_ref[...].astype(jnp.float32)), axis=-1, keepdims=True)
        * inv_hidden
    )
    # eps is added to the root, matching PyTorch x / (norm + eps).
    inv = pl.reciprocal(jnp.sqrt(ms) + eps, approx=approx_recip)
    # Scale in the ref dtype: bf16 stays on packed vregs (2x elems per VALU op)
    # and skips a separate downcast; for f32 it's a plain broadcast multiply.
    o_ref[...] = (x_ref[...] * inv.astype(o_ref.dtype)).astype(o_ref.dtype)


def _round_down(v, m):
    return (v // m) * m


def _round_up(v, m):
    return ((v + m - 1) // m) * m


def _physical_vmem_bytes():
    """Trace-time VMEM capacity query; falls back to the v7x worst case."""
    try:
        info = pltpu.get_tpu_info()
        cap = getattr(info, "vmem_capacity_bytes", None)
        if cap:
            return int(cap)
    except Exception:
        pass
    return 64 * 1024 * 1024  # v7x physical VMEM (smallest generation)


def _pick_block_rows(rows, hidden, itemsize, sublane, budget):
    """Largest legal row tile inside the pipelined VMEM budget, with enough
    grid steps that BlockSpec double buffering actually hides the DMAs."""
    if rows < 2 * sublane:
        # Tiny input: one full-extent block (block dim == array dim is legal).
        return rows
    row_bytes = hidden * itemsize
    # Pipelined footprint ~= 2 input + 2 output double-buffered blocks
    # (the full-tile f32 temp is gone).
    tm = budget // (4 * row_bytes)
    tm = max(sublane, min(tm, 8192))
    # Target >= 8 grid steps (>= 4 per TensorCore on 2-core chips) as long as
    # each block stays >= ~2 MiB; otherwise settle for >= 2 blocks so both
    # cores on v7x still get work.
    tm_steps8 = _round_up(pl.cdiv(rows, 8), sublane)
    tm_steps2 = _round_up(pl.cdiv(rows, 2), sublane)
    if tm_steps8 * row_bytes >= 2 * 1024 * 1024:
        tm = min(tm, tm_steps8)
    else:
        tm = min(tm, tm_steps2)
    return max(sublane, _round_down(tm, sublane))


def rmsnorm(x, eps=1e-8, block_rows=None):
    """RMSNorm over the last axis of x (any rank >= 1)."""
    orig_shape = x.shape
    hidden = int(orig_shape[-1])
    rows = 1
    for d in orig_shape[:-1]:
        rows *= int(d)
    rows = max(rows, 1)
    x2d = x.reshape(rows, hidden)

    itemsize = jnp.dtype(x.dtype).itemsize
    # Packed sublane tile: 8 rows for f32, 16 for bf16, 32 for int8/fp8.
    sublane = max(8, 32 // max(itemsize, 1))

    # Generation-aware budgets: v5e/v6e have 128 MiB physical VMEM, v7x 64 MiB.
    phys_vmem = _physical_vmem_bytes()
    if phys_vmem >= 128 * 1024 * 1024:
        budget, vmem_limit = 64 * 1024 * 1024, 96 * 1024 * 1024
    else:
        budget, vmem_limit = 32 * 1024 * 1024, 48 * 1024 * 1024

    if block_rows is None:
        tm = _pick_block_rows(rows, hidden, itemsize, sublane, budget)
    else:
        tm = block_rows

    grid = (pl.cdiv(rows, tm),)

    kernel = functools.partial(
        _rmsnorm_kernel,
        eps=float(eps),
        inv_hidden=1.0 / float(hidden),
        # EUP approx reciprocal only when the output is bf16 (the error is
        # invisible at bf16 precision); exact reciprocal otherwise.
        approx_recip=bool(jnp.dtype(x.dtype) == jnp.dtype(jnp.bfloat16)),
    )

    # NOTE: hidden < 128 (as in the small self-test) forces masked partial
    # stores; production hidden sizes (multiples of 128) take the fast path.
    # Ragged last row-blocks are handled by Pallas masking (rows independent).
    # TODO(synk): sweep pipeline_mode=pl.Buffered(3) on the input spec for v7x
    # if a profile still shows exposed DMA at block boundaries.
    out2d = pl.pallas_call(
        kernel,
        out_shape=jax.ShapeDtypeStruct((rows, hidden), x.dtype),
        grid_spec=pltpu.PrefetchScalarGridSpec(
            num_scalar_prefetch=0,
            grid=grid,
            in_specs=[pl.BlockSpec((tm, hidden), lambda i: (i, 0))],
            out_specs=pl.BlockSpec((tm, hidden), lambda i: (i, 0)),
        ),
        compiler_params=pltpu.CompilerParams(
            dimension_semantics=("parallel",),
            vmem_limit_bytes=vmem_limit,
        ),
    )(x2d)

    return out2d.reshape(orig_shape)


def rmsnorm_ref(x, eps=1e-8):
    xf = x.astype(jnp.float32)
    norm = jnp.sqrt(jnp.mean(xf * xf, axis=-1, keepdims=True))
    return (xf / (norm + eps)).astype(x.dtype)


if __name__ == "__main__":
    key = jax.random.PRNGKey(0)
    # Small shapes consistent with the module: batch=2, seq=8, hidden=32.
    x = jax.random.normal(key, (2, 8, 32), dtype=jnp.float32)

    out = rmsnorm(x, eps=1e-8)
    out = jax.block_until_ready(out)

    ref = rmsnorm_ref(x, eps=1e-8)
    assert out.shape == x.shape
    assert jnp.allclose(out, ref, atol=1e-5, rtol=1e-5), "mismatch vs reference"

    print("KERNEL_OK")
</pallas_src>

<mosaic_0001>
module attributes {stable_mosaic.version = 11 : i64} {
  func.func @_rmsnorm_kernel(%arg0: i32, %arg1: memref<8x32xf32, #tpu.memory_space<vmem>>, %arg2: memref<8x32xf32, #tpu.memory_space<vmem>>) attributes {dimension_semantics = [#tpu.dimension_semantics<parallel>], iteration_bounds = array<i64: 2>, scalar_prefetch = 0 : i64, scratch_operands = 0 : i64, tpu.core_type = #tpu.core_type<tc>, window_params = [{transform_indices = @transform_0, window_bounds = array<i64: 8, 32>}, {transform_indices = @transform_1, window_bounds = array<i64: 8, 32>}]} {
    %c0 = arith.constant 0 : index
    %c0_0 = arith.constant 0 : index
    %0 = vector.load %arg1[%c0, %c0_0] : memref<8x32xf32, #tpu.memory_space<vmem>>, vector<8x32xf32>
    %1 = arith.mulf %0, %0 : vector<8x32xf32>
    %cst = arith.constant dense<0.000000e+00> : vector<8xf32>
    %2 = vector.multi_reduction <add>, %1, %cst [1] : vector<8x32xf32> to vector<8xf32>
    %3 = vector.shape_cast %2 : vector<8xf32> to vector<8x1xf32>
    %cst_1 = arith.constant 3.125000e-02 : f32
    %4 = vector.broadcast %cst_1 : f32 to vector<8x1xf32>
    %5 = arith.mulf %3, %4 : vector<8x1xf32>
    %6 = math.sqrt %5 : vector<8x1xf32>
    %cst_2 = arith.constant 9.99999993E-9 : f32
    %7 = vector.broadcast %cst_2 : f32 to vector<8x1xf32>
    %8 = arith.addf %6, %7 : vector<8x1xf32>
    %9 = tpu.reciprocal %8 : vector<8x1xf32> -> vector<8x1xf32>
    %c0_3 = arith.constant 0 : index
    %c0_4 = arith.constant 0 : index
    %10 = vector.load %arg1[%c0_3, %c0_4] : memref<8x32xf32, #tpu.memory_space<vmem>>, vector<8x32xf32>
    %11 = vector.broadcast %9 : vector<8x1xf32> to vector<8x32xf32>
    %12 = arith.mulf %10, %11 : vector<8x32xf32>
    %c0_5 = arith.constant 0 : index
    %c0_6 = arith.constant 0 : index
    %13 = vector.load %arg2[%c0_5, %c0_6] : memref<8x32xf32, #tpu.memory_space<vmem>>, vector<8x32xf32>
    tpu.vector_store %arg2[%c0_5, %c0_6], %12 {strides = array<i32>} : memref<8x32xf32, #tpu.memory_space<vmem>>, vector<8x32xf32>,
    return
  }
  func.func @transform_0(%arg0: i32) -> (i32, i32) {
    %c0_i32 = arith.constant 0 : i32
    %c0_i32_0 = arith.constant 0 : i32
    return %arg0, %c0_i32 : i32, i32
  }
  func.func @transform_1(%arg0: i32) -> (i32, i32) {
    %c0_i32 = arith.constant 0 : i32
    %c0_i32_0 = arith.constant 0 : i32
    return %arg0, %c0_i32 : i32, i32
  }
}

</mosaic_0001>

<llo_original>
// kernel: tpu_custom_call.1
$region0: #{tpu_custom_call.1}
  #allocation0 [shape = 'u32[]', space=smem, size = 0x4, offset = 0x4, fixed_abs, tag = 'smem constant byte address 0x4 - core index']
  #allocation1 [shape = 'u32[144,128]{1,0:T(1,128)}', space=vmem, size = 0x12000, scoped, tag = 'internal scratch']
  %s0 = inlined_call_operand.hbm [shape: f32[16,32], index: 0, kind: input, shape index: {}]
  %s1 = inlined_call_operand.hbm [shape: f32[16,32], index: 1, kind: output, shape index: {}]
  %s2 = sld [smem:[#allocation0]]
  $region41: #{tpu_custom_call.1} parent=0
    _
  %s4 = ssub.s32 1, %s2
  %s5 = scalar_select 0, %s4, %s2
  $region1: #{tpu_custom_call.1} parent=0
    #allocation2 [shape = 'u8[8192]{0}', space=vmem, size = 0x2000, scoped, tag = 'input window, operand 0']
    #allocation3 [shape = 's32[2]{0}', space=sflag, size = 0x8, scoped, tag = 'scoped memory for tpu_custom_call.1']
    #allocation4 [shape = 's32[2]{0}', space=sflag, size = 0x8, scoped, tag = 'scoped memory for tpu_custom_call.1']
    #allocation5 [shape = 'u8[8192]{0}', space=vmem, size = 0x2000, scoped, tag = 'output window, operand 0']
    %6 = vsyncpa [#allocation3], 0
    %s7 = scalar_lea.sflag [#allocation3], 1
    %8 = vsyncpa %s7, 0
    %9 = vsyncpa [#allocation4], 0
    %s10 = scalar_lea.sflag [#allocation4], 1
    %11 = vsyncpa %s10, 0
    loop: start=0, step=1, limit=4
    $region2: #{tpu_custom_call.1} parent=1 // loop_pre_header
      _
    $region3: #{tpu_custom_call.1} parent=1 // loop_header
      %s13 = sphi 0, %s17
      %p14 = scmp.ge.s32.totalorder %s13, 4
      %s23 = sphi 0, %s25
      %s26 = sphi 0, %s23
      %s27 = sphi 0, %s26
      %s43 = sphi 0, %s27
      %s49 = sphi 0, %s51
      %s52 = sphi 0, %s49
      %s53 = sphi 0, %s52
      %s69 = sphi 0, %s53
    $region4: #{tpu_custom_call.1} parent=1 // loop_header_branch
      %16 = sbr.rel (%p14) target = $region8
    $region5: #{tpu_custom_call.1} parent=1 // loop_body
      %s18 = ssub.s32 %s13, 1
      %s19 = ssub.s32 %s13, 2
      %s20 = sadd.s32 %s13, 1
      %s21 = ssub.s32 %s13, %s20
      %p22 = scmp.eq.s32.totalorder %s21, 0
      %s24 = sadd.s32 %s23, 1
      %s25 = scalar_select %p22, %s23, %s24
      %p28 = pneg %p22
      %p29 = scmp.eq.s32.totalorder %s13, 1
      %p30 = por %p28, %p29
      %p31 = scmp.ne.s32.totalorder %s23, %s26
      %p32 = scmp.eq.s32.totalorder %s13, 0
      %p33 = por %p31, %p32
      %p34 = scmp.ne.s32.totalorder %s23, %s26
      %p35 = scmp.eq.s32.totalorder %s18, 1
      %p36 = por %p34, %p35
      %p37 = scmp.ne.s32.totalorder %s26, %s27
      %p38 = scmp.eq.s32.totalorder %s18, 0
      %p39 = por %p37, %p38
      %p40 = scmp.ne.s32.totalorder %s26, %s27
      %p41 = scmp.eq.s32.totalorder %s19, 1
      %p42 = por %p40, %p41
      %p44 = scmp.ne.s32.totalorder %s27, %s43
      %p45 = scmp.eq.s32.totalorder %s19, 0
      %p46 = por %p44, %p45
      %s47 = ssub.s32 %s13, %s20
      %p48 = scmp.eq.s32.totalorder %s47, 0
      %s50 = sadd.s32 %s49, 1
      %s51 = scalar_select %p48, %s49, %s50
      %p54 = pneg %p48
      %p55 = scmp.eq.s32.totalorder %s13, 1
      %p56 = por %p54, %p55
      %p57 = scmp.ne.s32.totalorder %s49, %s52
      %p58 = scmp.eq.s32.totalorder %s13, 0
      %p59 = por %p57, %p58
      %p60 = scmp.ne.s32.totalorder %s49, %s52
      %p61 = scmp.eq.s32.totalorder %s18, 1
      %p62 = por %p60, %p61
      %p63 = scmp.ne.s32.totalorder %s52, %s53
      %p64 = scmp.eq.s32.totalorder %s18, 0
      %p65 = por %p63, %p64
      %p66 = scmp.ne.s32.totalorder %s52, %s53
      %p67 = scmp.eq.s32.totalorder %s19, 1
      %p68 = por %p66, %p67
      %p70 = scmp.ne.s32.totalorder %s53, %s69
      %p71 = scmp.eq.s32.totalorder %s19, 0
      %p72 = por %p70, %p71
      %p73 = scmp.le.s32.totalorder 1, %s13
      %p74 = scmp.lt.s32.totalorder %s13, 3
      %p75 = pnand %p73, %p74
      %p76 = pneg %p75
      // Predicated region
      $region9: #{tpu_custom_call.1} parent=5 // pred_check
        _
      $region10: #{tpu_custom_call.1} parent=5 // pred_check_branch
        %78 = sbr.rel (%p75) target = $region12
      $region11: #{tpu_custom_call.1} parent=5 // pred_region
        %s79 = ssub.s32 %s13, 1
      $region12: #{tpu_custom_call.1} parent=5 // pred_fallthru
        _
      %p80 = scmp.lt.s32.totalorder %s13, 2
      // Predicated region
      $region13: #{tpu_custom_call.1} parent=5 // pred_check
        %p81 = pneg %p80
      $region14: #{tpu_custom_call.1} parent=5 // pred_check_branch
        %83 = sbr.rel (%p81) target = $region16
      $region15: #{tpu_custom_call.1} parent=5 // pred_region
        // Predicated region
        $region17: #{tpu_custom_call.1} parent=15 // pred_check
          %p84 = pneg %p33
        $region18: #{tpu_custom_call.1} parent=15 // pred_check_branch
          %86 = sbr.rel (%p84) target = $region20
        $region19: #{tpu_custom_call.1} parent=15 // pred_region
          %s87 = sand.u32 %s23, 1
          %s88 = scalar_lea.sflag [#allocation3], %s87
          %s89 = sand.u32 %s23, 1
          %s90 = smul.addr %s89, 8
          %s91 = scalar_lea.vmem [#allocation2], %s90
          %s93 = ssub.s32 128, 128
          %94 = vsyncadd %s88, %s93
          %s95 = smul.addr %s13, 128
          %s96 = scalar_lea.hbm %s0, %s95
          %s98 = sshll.u32 %s91, 4
          %s99 = int_to_ptr.vmem [resolvable:$true] %s98
          %101 = dma.hbm_to_vmem [thread:$0]  %s96, 128, %s99, %s88
        $region20: #{tpu_custom_call.1} parent=15 // pred_fallthru
          _
      $region16: #{tpu_custom_call.1} parent=5 // pred_fallthru
        _
      %p102 = scmp.le.s32.totalorder 1, %s13
      %p103 = scmp.lt.s32.totalorder %s13, 3
      %p104 = pnand %p102, %p103
      %p105 = pneg %p104
      // Predicated region
      $region21: #{tpu_custom_call.1} parent=5 // pred_check
        _
      $region22: #{tpu_custom_call.1} parent=5 // pred_check_branch
        %107 = sbr.rel (%p104) target = $region24
      $region23: #{tpu_custom_call.1} parent=5 // pred_region
        %s108 = ssub.s32 %s13, 1
        %s109 = sand.u32 %s26, 1
        %s110 = scalar_lea.sflag [#allocation3], %s109
        %s111 = sand.u32 %s26, 1
        %s112 = smul.addr %s111, 8
        %s113 = scalar_lea.vmem [#allocation2], %s112
        // Predicated region
        $region25: #{tpu_custom_call.1} parent=23 // pred_check
          %p114 = pneg %p39
        $region26: #{tpu_custom_call.1} parent=23 // pred_check_branch
          %116 = sbr.rel (%p114) target = $region28
        $region27: #{tpu_custom_call.1} parent=23 // pred_region
          %117 = dma.done %s110, 128
        $region28: #{tpu_custom_call.1} parent=23 // pred_fallthru
          _
        %s118 = sand.u32 %s26, 1
        %s119 = scalar_lea.sflag [#allocation3], %s118
        %s120 = sand.u32 %s26, 1
        %s121 = smul.addr %s120, 8
        %s122 = scalar_lea.vmem [#allocation2], %s121
        %p123 = pneg %p39
        %p124 = pneg %p36
        %p125 = pneg %p65
        %p126 = pneg %p62
        %s127 = sand.u32 %s52, 1
        %s128 = scalar_lea.sflag [#allocation4], %s127
        %s129 = sand.u32 %s52, 1
        %s130 = smul.addr %s129, 8
        %s131 = scalar_lea.vmem [#allocation5], %s130
        %v132 = vld [vmem:[%s113] sm:$0xff]
        %v133 = vmul.f32 %v132, %v132
        %vm134 = vcmask 261120
        %v135 = vsel %vm134, %v133, 0.0
        %136 = vadd.xlane.f32.xlu0 %v135
        %v137 = vpop.xlane.xlu0 %136
        %v138 = vmul.f32 %v137, 0.03125
        %v139 = vrsqrt.pop %v138
        %v140 = vmul.f32 %v138, %v139
        %vm141 = vcmp.eq.f32.partialorder %v138, inf
        %v142 = vsel %vm141, %v138, %v140
        %vm143 = vcmp.eq.f32.partialorder %v138, 0.0
        %v144 = vand.u32 %v138, 2147483648
        %v145 = vsel %vm143, %v144, %v142
        %v146 = vadd.f32 %v145, 1e-08
        %v147 = vrcp.pop %v146
        %v148 = vmul.f32 %v132, %v147
        %149 = vst.msk [vmem:[%s131] sm:$0xff] %vm134, %v148
        %s150 = sand.u32 %s52, 1
        %s151 = scalar_lea.sflag [#allocation4], %s150
        %s152 = sand.u32 %s52, 1
        %s153 = smul.addr %s152, 8
        %s154 = scalar_lea.vmem [#allocation5], %s153
        // Predicated region
        $region29: #{tpu_custom_call.1} parent=23 // pred_check
          %p155 = pneg %p62
        $region30: #{tpu_custom_call.1} parent=23 // pred_check_branch
          %157 = sbr.rel (%p155) target = $region32
        $region31: #{tpu_custom_call.1} parent=23 // pred_region
          %s159 = ssub.s32 128, 128
          %160 = vsyncadd %s151, %s159
          %s161 = smul.addr %s18, 128
          %s162 = scalar_lea.hbm %s1, %s161
          %s164 = sshll.u32 %s154, 4
          %s165 = int_to_ptr.vmem [resolvable:$true] %s164
          %167 = dma.vmem_to_hbm [thread:$0]  %s165, 128, %s162, %s151
        $region32: #{tpu_custom_call.1} parent=23 // pred_fallthru
          _
      $region24: #{tpu_custom_call.1} parent=5 // pred_fallthru
        _
      %p168 = scmp.le.s32.totalorder 2, %s13
      // Predicated region
      $region33: #{tpu_custom_call.1} parent=5 // pred_check
        %p169 = pneg %p168
      $region34: #{tpu_custom_call.1} parent=5 // pred_check_branch
        %171 = sbr.rel (%p169) target = $region36
      $region35: #{tpu_custom_call.1} parent=5 // pred_region
        %s172 = ssub.s32 %s13, 2
        // Predicated region
        $region37: #{tpu_custom_call.1} parent=35 // pred_check
          %p173 = pneg %p68
        $region38: #{tpu_custom_call.1} parent=35 // pred_check_branch
          %175 = sbr.rel (%p173) target = $region40
        $region39: #{tpu_custom_call.1} parent=35 // pred_region
          %s176 = sand.u32 %s53, 1
          %s177 = scalar_lea.sflag [#allocation4], %s176
          %s178 = sand.u32 %s53, 1
          %s179 = smul.addr %s178, 8
          %s180 = scalar_lea.vmem [#allocation5], %s179
          %181 = dma.done %s177, 128
        $region40: #{tpu_custom_call.1} parent=35 // pred_fallthru
          _
      $region36: #{tpu_custom_call.1} parent=5 // pred_fallthru
        _
    $region6: #{tpu_custom_call.1} parent=1 // loop_footer
      %s17 = sadd.s32 1, %s13
    $region7: #{tpu_custom_call.1} parent=1 // loop_footer_branch
      %12 = sbr.rel target = $region3
    $region8: #{tpu_custom_call.1} parent=1 // loop_exit
      _
    %182 = vsyncpa [#allocation3], 1
    %s183 = scalar_lea.sflag [#allocation3], 1
    %184 = vsyncpa %s183, 1
    %185 = vsyncpa [#allocation4], 1
    %s186 = scalar_lea.sflag [#allocation4], 1
    %187 = vsyncpa %s186, 1

</llo_original>
